<compile_context>
chip_gen: v6e
topology: v6e:2x2x1
jax: 0.10.0
libtpu: 0.0.40
codegen_flags: <defaults>
</compile_context>

<pallas_src>
import jax
import jax.numpy as jnp
from jax.experimental import pallas as pl
from jax.experimental.pallas import tpu as pltpu


# ---------------------------------------------------------------------------
# Fused Pallas kernel:  (patches @ W + b)  ->  LayerNorm
# ---------------------------------------------------------------------------

def _patch_embed_kernel(p_ref, w_ref, b_ref, g_ref, bt_ref, o_ref):
    # p: (bm, K) bf16, w: (K, E) bf16, b/g/bt: (1, E) f32  ->  o: (bm, E) f32
    y = jnp.dot(p_ref[...], w_ref[...], preferred_element_type=jnp.float32)
    y = y + b_ref[...]
    mean = jnp.mean(y, axis=-1, keepdims=True)
    var = jnp.mean((y - mean) ** 2, axis=-1, keepdims=True)
    o_ref[...] = (y - mean) * jax.lax.rsqrt(var + 1e-5) * g_ref[...] + bt_ref[...]


def _pick_block_rows(m, target=256):
    """Largest row-block <= target that evenly divides m (multiple of 16 for bf16)."""
    if m <= target:
        return m
    for bm in range(target, 15, -16):
        if m % bm == 0:
            return bm
    return m


# ---------------------------------------------------------------------------
# OverlapPatchEmbed forward (Pallas-backed)
# ---------------------------------------------------------------------------

def overlap_patch_embed(x, params, patch_size=7, stride=4):
    B, Cin, H, W = x.shape
    E = params["w_proj"].shape[0]
    pad = patch_size // 2
    Ho = (H + 2 * pad - patch_size) // stride + 1
    Wo = (W + 2 * pad - patch_size) // stride + 1
    N = Ho * Wo
    M = B * N
    Kdim = Cin * patch_size * patch_size

    # ---- im2col for the overlapping conv (trace-time XLA glue, zero-padding) ------
    # TODO(synk): overlapping conv windows have no rectangular BlockSpec tiling; patch
    # extraction stays as plain-JAX pad/slice glue feeding the fused Pallas matmul.
    xp = jnp.pad(x, ((0, 0), (0, 0), (pad, pad), (pad, pad)))
    cols = []
    for kh in range(patch_size):
        for kw in range(patch_size):
            cols.append(
                xp[:, :, kh : kh + stride * Ho : stride, kw : kw + stride * Wo : stride]
            )
    # (B, Cin, kh*kw, Ho, Wo) -> rows ordered (b, ho, wo), features ordered (cin, kh, kw)
    patches = (
        jnp.stack(cols, axis=2)
        .transpose(0, 3, 4, 1, 2)
        .reshape(M, Kdim)
    )

    # OIHW conv weight flattened with matching (cin, kh, kw) inner order -> (Kdim, E)
    w_flat = params["w_proj"].reshape(E, Kdim).T

    # bf16 operands for the MXU (accumulation stays f32 inside the kernel)
    patches_bf = patches.astype(jnp.bfloat16)
    w_bf = w_flat.astype(jnp.bfloat16)

    bm = _pick_block_rows(M)
    grid = (M // bm,)

    out = pl.pallas_call(
        _patch_embed_kernel,
        out_shape=jax.ShapeDtypeStruct((M, E), jnp.float32),
        grid=grid,
        in_specs=[
            pl.BlockSpec((bm, Kdim), lambda i: (i, 0)),   # patch rows (tiled over M)
            pl.BlockSpec((Kdim, E), lambda i: (0, 0)),    # conv weight (resident)
            pl.BlockSpec((1, E), lambda i: (0, 0)),       # conv bias
            pl.BlockSpec((1, E), lambda i: (0, 0)),       # LayerNorm gamma
            pl.BlockSpec((1, E), lambda i: (0, 0)),       # LayerNorm beta
        ],
        out_specs=pl.BlockSpec((bm, E), lambda i: (i, 0)),
        compiler_params=pltpu.CompilerParams(
            dimension_semantics=("parallel",)
        ),
    )(
        patches_bf,
        w_bf,
        params["b_proj"].reshape(1, E),
        params["gamma"].reshape(1, E),
        params["beta"].reshape(1, E),
    )
    return out.reshape(B, N, E), Ho, Wo


# ---------------------------------------------------------------------------
# Pure-JAX reference (mirrors the PyTorch forward exactly, f32 throughout)
# ---------------------------------------------------------------------------

def reference_forward(x, p, patch_size=7, stride=4):
    pad = patch_size // 2
    E = p["w_proj"].shape[0]
    y = jax.lax.conv_general_dilated(
        x, p["w_proj"], (stride, stride), ((pad, pad), (pad, pad)),
        dimension_numbers=("NCHW", "OIHW", "NCHW"),
    ) + p["b_proj"][None, :, None, None]
    B, _, Ho, Wo = y.shape
    y = y.reshape(B, E, Ho * Wo).transpose(0, 2, 1)          # (B, N, E)
    mean = y.mean(-1, keepdims=True)
    var = ((y - mean) ** 2).mean(-1, keepdims=True)
    y = (y - mean) / jnp.sqrt(var + 1e-5) * p["gamma"] + p["beta"]
    return y, Ho, Wo


# ---------------------------------------------------------------------------
# Main
# ---------------------------------------------------------------------------

if __name__ == "__main__":
    B, Cin, H, W = 2, 3, 16, 16
    patch_size, stride, embed_dim = 7, 4, 128   # lane-dense embed_dim (multiple of 128)

    key = jax.random.PRNGKey(0)
    k0, k1, k2 = jax.random.split(key, 3)
    init = lambda k, shape: (0.05 * jax.random.normal(k, shape)).astype(jnp.float32)

    params = {
        "w_proj": init(k0, (embed_dim, Cin, patch_size, patch_size)),  # Conv2d OIHW
        "b_proj": init(k1, (embed_dim,)),
        "gamma": jnp.ones((embed_dim,), jnp.float32),                  # nn.LayerNorm
        "beta": jnp.zeros((embed_dim,), jnp.float32),
    }

    x = jax.random.normal(k2, (B, Cin, H, W), dtype=jnp.float32)

    out, Ho, Wo = overlap_patch_embed(x, params, patch_size, stride)
    out = jax.block_until_ready(out)

    ref, Hr, Wr = reference_forward(x, params, patch_size, stride)
    assert (Ho, Wo) == (Hr, Wr), ((Ho, Wo), (Hr, Wr))
    assert out.shape == (B, Ho * Wo, embed_dim), out.shape
    max_diff = jnp.max(jnp.abs(out - ref))
    assert jnp.allclose(out, ref, rtol=2e-2, atol=2e-2), f"max abs diff {max_diff}"

    print("KERNEL_OK")
</pallas_src>

<mosaic_0001>
module attributes {stable_mosaic.version = 11 : i64} {
  func.func @_patch_embed_kernel(%arg0: i32, %arg1: memref<32x147xbf16, #tpu.memory_space<vmem>>, %arg2: memref<147x128xbf16, #tpu.memory_space<vmem>>, %arg3: memref<1x128xf32, #tpu.memory_space<vmem>>, %arg4: memref<1x128xf32, #tpu.memory_space<vmem>>, %arg5: memref<1x128xf32, #tpu.memory_space<vmem>>, %arg6: memref<32x128xf32, #tpu.memory_space<vmem>>) attributes {dimension_semantics = [#tpu.dimension_semantics<parallel>], iteration_bounds = array<i64: 1>, scalar_prefetch = 0 : i64, scratch_operands = 0 : i64, tpu.core_type = #tpu.core_type<tc>, window_params = [{transform_indices = @transform_0, window_bounds = array<i64: 32, 147>}, {pipeline_mode = #tpu.pipeline_mode<synchronous>, transform_indices = @transform_1, window_bounds = array<i64: 147, 128>}, {pipeline_mode = #tpu.pipeline_mode<synchronous>, transform_indices = @transform_2, window_bounds = array<i64: 1, 128>}, {pipeline_mode = #tpu.pipeline_mode<synchronous>, transform_indices = @transform_3, window_bounds = array<i64: 1, 128>}, {pipeline_mode = #tpu.pipeline_mode<synchronous>, transform_indices = @transform_4, window_bounds = array<i64: 1, 128>}, {transform_indices = @transform_5, window_bounds = array<i64: 32, 128>}]} {
    %c0 = arith.constant 0 : index
    %c0_0 = arith.constant 0 : index
    %0 = vector.load %arg1[%c0, %c0_0] : memref<32x147xbf16, #tpu.memory_space<vmem>>, vector<32x147xbf16>
    %c0_1 = arith.constant 0 : index
    %c0_2 = arith.constant 0 : index
    %1 = vector.load %arg2[%c0_1, %c0_2] : memref<147x128xbf16, #tpu.memory_space<vmem>>, vector<147x128xbf16>
    %cst = arith.constant dense<0.000000e+00> : vector<32x128xf32>
    %2 = tpu.matmul %0, %1, %cst {dimension_numbers = #tpu.dot_dimension_numbers<[1], [0], [0], [1], [0, 0, 1, 1], [], []>} : vector<32x147xbf16>, vector<147x128xbf16>, vector<32x128xf32> -> vector<32x128xf32>
    %c0_3 = arith.constant 0 : index
    %c0_4 = arith.constant 0 : index
    %3 = vector.load %arg3[%c0_3, %c0_4] : memref<1x128xf32, #tpu.memory_space<vmem>>, vector<1x128xf32>
    %4 = vector.broadcast %3 : vector<1x128xf32> to vector<32x128xf32>
    %5 = arith.addf %2, %4 : vector<32x128xf32>
    %cst_5 = arith.constant dense<0.000000e+00> : vector<32xf32>
    %6 = vector.multi_reduction <add>, %5, %cst_5 [1] : vector<32x128xf32> to vector<32xf32>
    %7 = vector.shape_cast %6 : vector<32xf32> to vector<32x1xf32>
    %cst_6 = arith.constant 1.280000e+02 : f32
    %8 = vector.broadcast %cst_6 : f32 to vector<32x1xf32>
    %9 = arith.divf %7, %8 : vector<32x1xf32>
    %10 = vector.broadcast %9 : vector<32x1xf32> to vector<32x128xf32>
    %11 = arith.subf %5, %10 : vector<32x128xf32>
    %12 = arith.mulf %11, %11 : vector<32x128xf32>
    %cst_7 = arith.constant dense<0.000000e+00> : vector<32xf32>
    %13 = vector.multi_reduction <add>, %12, %cst_7 [1] : vector<32x128xf32> to vector<32xf32>
    %14 = vector.shape_cast %13 : vector<32xf32> to vector<32x1xf32>
    %cst_8 = arith.constant 1.280000e+02 : f32
    %15 = vector.broadcast %cst_8 : f32 to vector<32x1xf32>
    %16 = arith.divf %14, %15 : vector<32x1xf32>
    %17 = vector.broadcast %9 : vector<32x1xf32> to vector<32x128xf32>
    %18 = arith.subf %5, %17 : vector<32x128xf32>
    %cst_9 = arith.constant 9.99999974E-6 : f32
    %19 = vector.broadcast %cst_9 : f32 to vector<32x1xf32>
    %20 = arith.addf %16, %19 : vector<32x1xf32>
    %21 = math.rsqrt %20 : vector<32x1xf32>
    %22 = vector.broadcast %21 : vector<32x1xf32> to vector<32x128xf32>
    %23 = arith.mulf %18, %22 : vector<32x128xf32>
    %c0_10 = arith.constant 0 : index
    %c0_11 = arith.constant 0 : index
    %24 = vector.load %arg4[%c0_10, %c0_11] : memref<1x128xf32, #tpu.memory_space<vmem>>, vector<1x128xf32>
    %25 = vector.broadcast %24 : vector<1x128xf32> to vector<32x128xf32>
    %26 = arith.mulf %23, %25 : vector<32x128xf32>
    %c0_12 = arith.constant 0 : index
    %c0_13 = arith.constant 0 : index
    %27 = vector.load %arg5[%c0_12, %c0_13] : memref<1x128xf32, #tpu.memory_space<vmem>>, vector<1x128xf32>
    %28 = vector.broadcast %27 : vector<1x128xf32> to vector<32x128xf32>
    %29 = arith.addf %26, %28 : vector<32x128xf32>
    %c0_14 = arith.constant 0 : index
    %c0_15 = arith.constant 0 : index
    %30 = vector.load %arg6[%c0_14, %c0_15] : memref<32x128xf32, #tpu.memory_space<vmem>>, vector<32x128xf32>
    tpu.vector_store %arg6[%c0_14, %c0_15], %29 {strides = array<i32>} : memref<32x128xf32, #tpu.memory_space<vmem>>, vector<32x128xf32>,
    return
  }
  func.func @transform_0(%arg0: i32) -> (i32, i32) {
    %c0_i32 = arith.constant 0 : i32
    %c0_i32_0 = arith.constant 0 : i32
    return %arg0, %c0_i32 : i32, i32
  }
  func.func @transform_1(%arg0: i32) -> (i32, i32) {
    %c0_i32 = arith.constant 0 : i32
    %c0_i32_0 = arith.constant 0 : i32
    %c0_i32_1 = arith.constant 0 : i32
    return %c0_i32, %c0_i32_0 : i32, i32
  }
  func.func @transform_2(%arg0: i32) -> (i32, i32) {
    %c0_i32 = arith.constant 0 : i32
    %c0_i32_0 = arith.constant 0 : i32
    %c0_i32_1 = arith.constant 0 : i32
    return %c0_i32, %c0_i32_0 : i32, i32
  }
  func.func @transform_3(%arg0: i32) -> (i32, i32) {
    %c0_i32 = arith.constant 0 : i32
    %c0_i32_0 = arith.constant 0 : i32
    %c0_i32_1 = arith.constant 0 : i32
    return %c0_i32, %c0_i32_0 : i32, i32
  }
  func.func @transform_4(%arg0: i32) -> (i32, i32) {
    %c0_i32 = arith.constant 0 : i32
    %c0_i32_0 = arith.constant 0 : i32
    %c0_i32_1 = arith.constant 0 : i32
    return %c0_i32, %c0_i32_0 : i32, i32
  }
  func.func @transform_5(%arg0: i32) -> (i32, i32) {
    %c0_i32 = arith.constant 0 : i32
    %c0_i32_0 = arith.constant 0 : i32
    return %arg0, %c0_i32 : i32, i32
  }
}

</mosaic_0001>

<llo_original>
// kernel: tpu_custom_call.1
$region0: #{tpu_custom_call.1}
  #allocation0 [shape = 'u32[]', space=smem, size = 0x4, offset = 0x4, fixed_abs, tag = 'smem constant byte address 0x4 - core index']
  #allocation1 [shape = 'u32[144,128]{1,0:T(1,128)}', space=vmem, size = 0x12000, scoped, tag = 'internal scratch']
  %s0 = inlined_call_operand.hbm [shape: bf16[32,147], index: 0, kind: input, shape index: {}]
  %s1 = inlined_call_operand.hbm [shape: bf16[147,128], index: 1, kind: input, shape index: {}]
  %s2 = inlined_call_operand.vmem [shape: f32[1,128], index: 2, kind: input, shape index: {}]
  %s3 = inlined_call_operand.vmem [shape: f32[1,128], index: 3, kind: input, shape index: {}]
  %s4 = inlined_call_operand.vmem [shape: f32[1,128], index: 4, kind: input, shape index: {}]
  %s5 = inlined_call_operand.hbm [shape: f32[32,128], index: 5, kind: output, shape index: {}]
  %s6 = sld [smem:[#allocation0]]
  $region38: #{tpu_custom_call.1} parent=0
    _
  %s8 = ssub.s32 1, %s6
  %s9 = scalar_select 0, %s8, %s6
  $region1: #{tpu_custom_call.1} parent=0
    #allocation2 [shape = 'u8[16384]{0}', space=vmem, size = 0x4000, scoped, tag = 'input window, operand 0, single buffered']
    #allocation3 [shape = 's32[1]{0}', space=sflag, size = 0x4, scoped, tag = 'scoped memory for tpu_custom_call.1']
    #allocation4 [shape = 's32[1]{0}', space=sflag, size = 0x4, scoped, tag = 'scoped memory for tpu_custom_call.1']
    #allocation5 [shape = 'u8[38912]{0}', space=vmem, size = 0x9800, scoped, tag = 'input window, operand 1, single buffered']
    #allocation6 [shape = 's32[1]{0}', space=sflag, size = 0x4, scoped, tag = 'scoped memory for tpu_custom_call.1']
    #allocation7 [shape = 'u8[16384]{0}', space=vmem, size = 0x4000, scoped, tag = 'output window, operand 0, single buffered']
    %10 = vsyncpa [#allocation3], 0
    %11 = vsyncpa [#allocation6], 0
    %12 = vsyncpa [#allocation4], 0
    // Predicated region
    $region2: #{tpu_custom_call.1} parent=1 // pred_check
      _
    $region3: #{tpu_custom_call.1} parent=1 // pred_check_branch
      %14 = sbr.rel (0) target = $region5
    $region4: #{tpu_custom_call.1} parent=1 // pred_region
      %s16 = ssub.s32 512, 512
      %17 = vsyncadd [#allocation3], %s16
      %s18 = sshll.u32 [#allocation2], 4
      %s19 = int_to_ptr.vmem [resolvable:$true] %s18
      %24 = dma.hbm_to_vmem [thread:$0]  %s0, 512, %s19, [#allocation3], 128, 128, 8
    $region5: #{tpu_custom_call.1} parent=1 // pred_fallthru
      _
    // Predicated region
    $region6: #{tpu_custom_call.1} parent=1 // pred_check
      _
    $region7: #{tpu_custom_call.1} parent=1 // pred_check_branch
      %26 = sbr.rel (0) target = $region9
    $region8: #{tpu_custom_call.1} parent=1 // pred_region
      %s28 = ssub.s32 1216, 1216
      %29 = vsyncadd [#allocation6], %s28
      %s30 = sshll.u32 [#allocation5], 4
      %s31 = int_to_ptr.vmem [resolvable:$true] %s30
      %36 = dma.hbm_to_vmem [thread:$0]  %s1, 1216, %s31, [#allocation6], 64, 64, 4
    $region9: #{tpu_custom_call.1} parent=1 // pred_fallthru
      _
    // Predicated region
    $region10: #{tpu_custom_call.1} parent=1 // pred_check
      _
    $region11: #{tpu_custom_call.1} parent=1 // pred_check_branch
      %38 = sbr.rel (0) target = $region13
    $region12: #{tpu_custom_call.1} parent=1 // pred_region
      _
    $region13: #{tpu_custom_call.1} parent=1 // pred_fallthru
      _
    // Predicated region
    $region14: #{tpu_custom_call.1} parent=1 // pred_check
      _
    $region15: #{tpu_custom_call.1} parent=1 // pred_check_branch
      %40 = sbr.rel (0) target = $region17
    $region16: #{tpu_custom_call.1} parent=1 // pred_region
      _
    $region17: #{tpu_custom_call.1} parent=1 // pred_fallthru
      _
    // Predicated region
    $region18: #{tpu_custom_call.1} parent=1 // pred_check
      _
    $region19: #{tpu_custom_call.1} parent=1 // pred_check_branch
      %42 = sbr.rel (0) target = $region21
    $region20: #{tpu_custom_call.1} parent=1 // pred_region
      _
    $region21: #{tpu_custom_call.1} parent=1 // pred_fallthru
      _
    // Predicated region
    $region22: #{tpu_custom_call.1} parent=1 // pred_check
      _
    $region23: #{tpu_custom_call.1} parent=1 // pred_check_branch
      %44 = sbr.rel (0) target = $region25
    $region24: #{tpu_custom_call.1} parent=1 // pred_region
      %45 = dma.done [#allocation3], 512
    $region25: #{tpu_custom_call.1} parent=1 // pred_fallthru
      _
    // Predicated region
    $region26: #{tpu_custom_call.1} parent=1 // pred_check
      _
    $region27: #{tpu_custom_call.1} parent=1 // pred_check_branch
      %47 = sbr.rel (0) target = $region29
    $region28: #{tpu_custom_call.1} parent=1 // pred_region
      %48 = dma.done [#allocation6], 1216
    $region29: #{tpu_custom_call.1} parent=1 // pred_fallthru
      _
    %v50 = vld [vmem:[#allocation2] sm:$0xff]
    %v51 = vld [vmem:[#allocation2 + $0x8] sm:$0xff]
    %v52 = vld [vmem:[#allocation2 + $0x10] sm:$0xff]
    %v53 = vld [vmem:[#allocation2 + $0x18] sm:$0xff]
    %v54 = vld [vmem:[#allocation5] sm:$0xf]
    %v55 = vld [vmem:[#allocation5 + $0x4] sm:$0xf]
    %v56 = vld [vmem:[#allocation5 + $0x8] sm:$0xf]
    %v57 = vld [vmem:[#allocation5 + $0xc] sm:$0xf]
    %v58 = vld [vmem:[#allocation5 + $0x10] sm:$0xf]
    %v59 = vld [vmem:[#allocation5 + $0x14] sm:$0xf]
    %v60 = vld [vmem:[#allocation5 + $0x18] sm:$0xf]
    %v61 = vld [vmem:[#allocation5 + $0x1c] sm:$0xf]
    %v62 = vld [vmem:[#allocation5 + $0x20] sm:$0xf]
    %v63 = vld [vmem:[#allocation5 + $0x24] sm:$0xf]
    %v64 = vld [vmem:[#allocation5 + $0x28] sm:$0xf]
    %v65 = vld [vmem:[#allocation5 + $0x2c] sm:$0xf]
    %v66 = vld [vmem:[#allocation5 + $0x30] sm:$0xf]
    %v67 = vld [vmem:[#allocation5 + $0x34] sm:$0xf]
    %v68 = vld [vmem:[#allocation5 + $0x38] sm:$0xf]
    %v69 = vld [vmem:[#allocation5 + $0x3c] sm:$0xf]
    %v70 = vld [vmem:[#allocation5 + $0x40] sm:$0xf]
    %v71 = vld [vmem:[#allocation5 + $0x44] sm:$0xf]
    %v72 = vld [vmem:[#allocation5 + $0x48] sm:$0x3]
    %v73 = vld [vmem:[%s2] sm:$0x1]
    %v75 = vlaneseq
    %v76 = vshrl.u32 %v75, 7
    %v77 = vsub.s32 0, %v76
    %v78 = vrot.slane %v73, %v77
    %v84 = vunpack.c.l.b16 %v50
    %v85 = vunpack.c.h.b16 %v50
    %v86 = vunpack.c.l.b16 %v51
    %v87 = vunpack.c.h.b16 %v51
    %v88 = vunpack.c.l.b16 %v52
    %v89 = vunpack.c.h.b16 %v52
    %v90 = vunpack.c.l.b16 %v53
    %v91 = vunpack.c.h.b16 %v53
    %v92 = vpack.c.b16 %v86, %v84
    %v93 = vpack.c.b16 %v87, %v85
    %v94 = vpack.c.b16 %v90, %v88
    %v95 = vpack.c.b16 %v91, %v89
    %v117 = vunpack.c.l.b16 %v54
    %v118 = vunpack.c.l.b16 %v55
    %v119 = vunpack.c.l.b16 %v56
    %v120 = vunpack.c.l.b16 %v57
    %v121 = vunpack.c.l.b16 %v58
    %v122 = vunpack.c.l.b16 %v59
    %v123 = vunpack.c.l.b16 %v60
    %v124 = vunpack.c.l.b16 %v61
    %v125 = vunpack.c.l.b16 %v62
    %v126 = vunpack.c.l.b16 %v63
    %v127 = vunpack.c.l.b16 %v64
    %v128 = vunpack.c.l.b16 %v65
    %v129 = vunpack.c.l.b16 %v66
    %v130 = vunpack.c.l.b16 %v67
    %v131 = vunpack.c.l.b16 %v68
    %v132 = vunpack.c.l.b16 %v69
    %v133 = vunpack.c.l.b16 %v70
    %v134 = vunpack.c.l.b16 %v71
    %v135 = vunpack.c.l.b16 %v72
    %v136 = vpack.c.b16 %v118, %v117
    %v137 = vpack.c.b16 %v120, %v119
    %v138 = vpack.c.b16 %v122, %v121
    %v139 = vpack.c.b16 %v124, %v123
    %v140 = vpack.c.b16 %v126, %v125
    %v141 = vpack.c.b16 %v128, %v127
    %v142 = vpack.c.b16 %v130, %v129
    %v143 = vpack.c.b16 %v132, %v131
    %v144 = vpack.c.b16 %v134, %v133
    %v145 = vpack.c.b16 %v135, %v135
    %vm155 = vcmask 154624
    %v157 = vsel %vm155, %v93, 0
    %v160 = vsel %vm155, %v95, 0
    %vm162 = vcmask 1040384
    %vm163 = vcmask 1041408
    %v164 = vsel %vm162, 4294967295, 65535
    %v165 = vsel %vm163, %v164, 0
    %v167 = vand.u32 %v145, %v165
    %169 = vmatprep.subr.bf16.mxu0 0
    %170 = vmatpush1.bf16.msra.mxu0 %v143
    %171 = vmatprep.subr.bf16.mxu0 0
    %172 = vmatpush1.bf16.msra.mxu0 %v142
    %173 = vmatprep.subr.bf16.mxu0 0
    %174 = vmatpush1.bf16.msra.mxu0 %v141
    %175 = vmatprep.subr.bf16.mxu0 0
    %176 = vmatpush1.bf16.msra.mxu0 %v140
    %177 = vmatprep.subr.bf16.mxu0 0
    %178 = vmatpush1.bf16.msra.mxu0 %v139
    %179 = vmatprep.subr.bf16.mxu0 0
    %180 = vmatpush1.bf16.msra.mxu0 %v138
    %181 = vmatprep.subr.bf16.mxu0 0
    %182 = vmatpush1.bf16.msra.mxu0 %v137
    %183 = vmatprep.subr.bf16.mxu0 0
    %184 = vmatpush1.bf16.msra.mxu0 %v136
    %185 = vmatprep.subr.bf16.mxu0 0
    %186 = vmatpush2.bf16.msra.mxu0 0
    %187 = vmatprep.subr.bf16.mxu0 0
    %188 = vmatpush2.bf16.msra.mxu0 0
    %189 = vmatprep.subr.bf16.mxu0 0
    %190 = vmatpush2.bf16.msra.mxu0 0
    %191 = vmatprep.subr.bf16.mxu0 0
    %192 = vmatpush2.bf16.msra.mxu0 0
    %193 = vmatprep.subr.bf16.mxu0 0
    %194 = vmatpush2.bf16.msra.mxu0 0
    %195 = vmatprep.subr.bf16.mxu0 0
    %196 = vmatpush2.bf16.msra.mxu0 0
    %197 = vmatprep.subr.bf16.mxu0 0
    %198 = vmatpush2.bf16.msra.mxu0 %v167
    %199 = vmatprep.subr.bf16.mxu0 0
    %200 = vmatpush2.bf16.msra.mxu0 %v144
    %201 = vmatprep.mubr.bf16.mxu0 %v157
    %202 = vmatmul.mubr.bf16.gmra.mxu0 %v92
    %v203 = vpop.f32.mrf.mxu0
    %v204 = vadd.f32 %v78, %v203
    %v205 = vpop.f32.mrf.mxu0
    %v206 = vpop.f32.mrf.mxu0
    %v207 = vadd.f32 %v78, %v206
    %v208 = vpop.f32.mrf.mxu0
    %209 = vmatprep.mubr.bf16.mxu0 %v160
    %210 = vmatmul.mubr.bf16.gmra.mxu0 %v94
    %v211 = vpop.f32.mrf.mxu0
    %v212 = vadd.f32 %v78, %v211
    %v213 = vpop.f32.mrf.mxu0
    %v214 = vpop.f32.mrf.mxu0
    %v215 = vadd.f32 %v78, %v214
    %v216 = vpop.f32.mrf.mxu0
    %217 = vdwg.mxu0
    %218 = vadd.xlane.f32.xlu0 %v204
    %v219 = vpop.xlane.xlu0 %218
    %220 = vadd.xlane.f32.xlu0 %v207
    %v221 = vpop.xlane.xlu0 %220
    %222 = vadd.xlane.f32.xlu0 %v212
    %v223 = vpop.xlane.xlu0 %222
    %224 = vadd.xlane.f32.xlu0 %v215
    %v225 = vpop.xlane.xlu0 %224
    %v226 = vrcp.pop 128.0
    %v227 = vmul.f32 %v219, %v226
    %v228 = vmul.f32 %v221, %v226
    %v229 = vmul.f32 %v223, %v226
    %v230 = vmul.f32 %v225, %v226
    %v231 = vsub.f32 %v204, %v227
    %v232 = vsub.f32 %v207, %v228
    %v233 = vsub.f32 %v212, %v229
    %v234 = vsub.f32 %v215, %v230
    %v235 = vmul.f32 %v231, %v231
    %v236 = vmul.f32 %v232, %v232
    %v237 = vmul.f32 %v233, %v233
    %v238 = vmul.f32 %v234, %v234
    %239 = vadd.xlane.f32.xlu0 %v235
    %v240 = vpop.xlane.xlu0 %239
    %241 = vadd.xlane.f32.xlu0 %v236
    %v242 = vpop.xlane.xlu0 %241
    %243 = vadd.xlane.f32.xlu0 %v237
    %v244 = vpop.xlane.xlu0 %243
    %245 = vadd.xlane.f32.xlu0 %v238
    %v246 = vpop.xlane.xlu0 %245
    %v247 = vmul.f32 %v240, %v226
    %v248 = vmul.f32 %v242, %v226
    %v249 = vmul.f32 %v244, %v226
    %v250 = vmul.f32 %v246, %v226
    %v251 = vadd.f32 %v247, 1e-05
    %v252 = vadd.f32 %v248, 1e-05
    %v253 = vadd.f32 %v249, 1e-05
    %v254 = vadd.f32 %v250, 1e-05
    %v255 = vrsqrt.pop %v251
    %v256 = vrsqrt.pop %v252
    %v257 = vrsqrt.pop %v253
    %v258 = vrsqrt.pop %v254
    %v259 = vmul.f32 %v231, %v255
    %v260 = vmul.f32 %v232, %v256
    %v261 = vmul.f32 %v233, %v257
    %v262 = vmul.f32 %v234, %v258
    %v263 = vld [vmem:[%s3] sm:$0x1]
    %v265 = vlaneseq
    %v266 = vshrl.u32 %v265, 7
    %v267 = vsub.s32 0, %v266
    %v268 = vrot.slane %v263, %v267
    %v270 = vmul.f32 %v259, %v268
    %v271 = vmul.f32 %v260, %v268
    %v272 = vmul.f32 %v261, %v268
    %v273 = vmul.f32 %v262, %v268
    %v274 = vld [vmem:[%s4] sm:$0x1]
    %v276 = vlaneseq
    %v277 = vshrl.u32 %v276, 7
    %v278 = vsub.s32 0, %v277
    %v279 = vrot.slane %v274, %v278
    %v281 = vadd.f32 %v270, %v279
    %v282 = vadd.f32 %v271, %v279
    %v283 = vadd.f32 %v272, %v279
    %v284 = vadd.f32 %v273, %v279
    %285 = vst [vmem:[#allocation7] sm:$0xff] %v281
    %286 = vst [vmem:[#allocation7 + $0x8] sm:$0xff] %v282
    %287 = vst [vmem:[#allocation7 + $0x10] sm:$0xff] %v283
    %288 = vst [vmem:[#allocation7 + $0x18] sm:$0xff] %v284
    // Predicated region
    $region30: #{tpu_custom_call.1} parent=1 // pred_check
      _
    $region31: #{tpu_custom_call.1} parent=1 // pred_check_branch
      %290 = sbr.rel (0) target = $region33
    $region32: #{tpu_custom_call.1} parent=1 // pred_region
      %s292 = ssub.s32 512, 512
      %293 = vsyncadd [#allocation4], %s292
      %s294 = sshll.u32 [#allocation7], 4
      %s295 = int_to_ptr.vmem [resolvable:$true] %s294
      %300 = dma.vmem_to_hbm [thread:$0]  %s295, 512, %s5, [#allocation4], 128, 128, 8
    $region33: #{tpu_custom_call.1} parent=1 // pred_fallthru
      _
    // Predicated region
    $region34: #{tpu_custom_call.1} parent=1 // pred_check
      _
    $region35: #{tpu_custom_call.1} parent=1 // pred_check_branch
      %302 = sbr.rel (0) target = $region37
    $region36: #{tpu_custom_call.1} parent=1 // pred_region
      %303 = dma.done [#allocation4], 512
    $region37: #{tpu_custom_call.1} parent=1 // pred_fallthru
      _
    %304 = vsyncpa [#allocation3], 1
    %305 = vsyncpa [#allocation6], 1
    %306 = vsyncpa [#allocation4], 1

</llo_original>
